<compile_context>
chip_gen: v6e
topology: v6e:2x2x1
jax: 0.10.0
libtpu: 0.0.40
codegen_flags: <defaults>
</compile_context>

<pallas_src>
import functools
import math

import jax
import jax.numpy as jnp
from jax.experimental import pallas as pl
from jax.experimental.pallas import tpu as pltpu

_ACT_DTYPE = jnp.bfloat16
_VMEM_LIMIT = 48 * 1024 * 1024   # raised scoped-VMEM cap; stays under v7x's 64 MiB physical
_EXPANSION = 4                   # Bottleneck expansion (block class not given in the source)


def _round_up(v, m):
    return (v + m - 1) // m * m


def _pick_tile(dim, prefs):
    """Largest preferred tile that evenly divides `dim`, else the full dim."""
    for t in prefs:
        if t <= dim and dim % t == 0:
            return t
    return dim


# -----------------------------------------------------------------------------
# Pallas kernels
# -----------------------------------------------------------------------------

def _matmul_kernel(x_ref, w_ref, o_ref, acc_ref):
    """Tiled matmul; grid = (M tiles, N tiles, K steps), K innermost ("arbitrary")."""
    k = pl.program_id(2)

    @pl.when(k == 0)
    def _():
        acc_ref[...] = jnp.zeros_like(acc_ref)

    acc_ref[...] += jnp.dot(x_ref[...], w_ref[...],
                            preferred_element_type=jnp.float32)

    @pl.when(k == pl.num_programs(2) - 1)
    def _():
        o_ref[...] = acc_ref[...].astype(o_ref.dtype)


def _conv3x3_shift_kernel(x_ref, w_ref, o_ref, acc_ref, *, wp, dil, m_rows):
    """3x3 stride-1 conv as 9 shifted matmuls on the zero-padded, row-flattened slab.

    x_ref : (Mp, Cin)     padded activation flattened to rows (resident in VMEM)
    w_ref : (9, Cin, tn)  per-tap weights for this Cout tile
    o_ref : (m_rows, tn)  conv output over the padded flat index space (cropped in XLA)
    """
    acc_ref[...] = jnp.zeros_like(acc_ref)
    for t in range(9):                       # static unrolled tap loop (no im2col)
        i, j = divmod(t, 3)
        shift = (i * wp + j) * dil           # static row shift for this tap
        acc_ref[...] += jnp.dot(x_ref[shift:shift + m_rows, :], w_ref[t],
                                preferred_element_type=jnp.float32)
    o_ref[...] = acc_ref[...].astype(o_ref.dtype)


def _pool3x3_shift_kernel(x_ref, o_ref, *, wp, m_rows):
    """Stride-1 3x3 max-pool via 9 shifted windows of the (-inf)-padded flat slab."""
    o_ref[...] = x_ref[0:m_rows, :]
    for t in range(1, 9):
        i, j = divmod(t, 3)
        shift = i * wp + j
        o_ref[...] = jnp.maximum(o_ref[...], x_ref[shift:shift + m_rows, :])


def _bn_stats_kernel(x_ref, sum_ref, sq_ref):
    """BN pass 1: per-channel sum / sum-of-squares accumulated over M tiles."""
    @pl.when(pl.program_id(0) == 0)
    def _():
        sum_ref[...] = jnp.zeros_like(sum_ref)
        sq_ref[...] = jnp.zeros_like(sq_ref)

    x = x_ref[...].astype(jnp.float32)
    sum_ref[...] += jnp.sum(x, axis=0, keepdims=True)
    sq_ref[...] += jnp.sum(x * x, axis=0, keepdims=True)


def _bn_scale_shift(sum_v, sq_v, g_v, b_v, inv_m):
    mean = sum_v * inv_m
    var = jnp.maximum(sq_v * inv_m - mean * mean, 0.0)
    scale = g_v * jax.lax.rsqrt(var + 1e-5)
    shift = b_v - mean * scale
    return scale, shift


def _bn_apply_kernel(x_ref, sum_ref, sq_ref, g_ref, b_ref, o_ref, *, inv_m, relu):
    """BN pass 2: normalize one M tile, optional fused ReLU."""
    scale, shift = _bn_scale_shift(sum_ref[...], sq_ref[...],
                                   g_ref[...], b_ref[...], inv_m)
    y = x_ref[...].astype(jnp.float32) * scale + shift
    if relu:
        y = jnp.maximum(y, 0.0)
    o_ref[...] = y.astype(o_ref.dtype)


def _bn_apply_add_relu_kernel(x_ref, res_ref, sum_ref, sq_ref, g_ref, b_ref, o_ref, *, inv_m):
    """BN pass 2 fused with the bottleneck residual add + ReLU."""
    scale, shift = _bn_scale_shift(sum_ref[...], sq_ref[...],
                                   g_ref[...], b_ref[...], inv_m)
    y = x_ref[...].astype(jnp.float32) * scale + shift + res_ref[...].astype(jnp.float32)
    o_ref[...] = jnp.maximum(y, 0.0).astype(o_ref.dtype)


# -----------------------------------------------------------------------------
# Pallas wrappers
# -----------------------------------------------------------------------------

def _matmul_f32acc(x2, w2):
    """bf16 x bf16 -> bf16 tiled matmul with f32 accumulation."""
    m, k = x2.shape
    _, n = w2.shape
    tm = _pick_tile(m, (256, 128, 64, 32, 16, 8))
    tn = _pick_tile(n, (256, 128))            # NOTE: prefer 128 on v5e (128-wide MXU)
    tk = _pick_tile(k, (512, 384, 256, 128))
    grid = (m // tm, n // tn, k // tk)
    return pl.pallas_call(
        _matmul_kernel,
        out_shape=jax.ShapeDtypeStruct((m, n), _ACT_DTYPE),
        grid_spec=pltpu.PrefetchScalarGridSpec(
            num_scalar_prefetch=0,
            grid=grid,
            in_specs=[pl.BlockSpec((tm, tk), lambda i, j, kk: (i, kk)),
                      pl.BlockSpec((tk, tn), lambda i, j, kk: (kk, j))],
            out_specs=pl.BlockSpec((tm, tn), lambda i, j, kk: (i, j)),
            scratch_shapes=[pltpu.VMEM((tm, tn), jnp.float32)],
        ),
        compiler_params=pltpu.CompilerParams(
            dimension_semantics=("parallel", "parallel", "arbitrary"),
            vmem_limit_bytes=_VMEM_LIMIT),
    )(x2.astype(_ACT_DTYPE), w2.astype(_ACT_DTYPE))


@functools.partial(jax.jit, static_argnames=("stride",))
def conv1x1(x, w, *, stride=1):
    """1x1 conv (bias=False). x: NHWC, w: (Cin, Cout). Stride via cheap XLA subsample."""
    if stride != 1:
        x = x[:, ::stride, ::stride, :]
    n, h, wdim, c = x.shape
    out = _matmul_f32acc(x.reshape(n * h * wdim, c), w)
    return out.reshape(n, h, wdim, -1)


def _extract_patches(x, kh, kw, stride, dilation, padding):
    """im2col fallback, used only for the tiny-Cin stem conv (Cin=1, one-time)."""
    n, h, w, c = x.shape
    xp = jnp.pad(x, ((0, 0), (padding, padding), (padding, padding), (0, 0)))
    hp, wp = h + 2 * padding, w + 2 * padding
    ho = (hp - (dilation * (kh - 1) + 1)) // stride + 1
    wo = (wp - (dilation * (kw - 1) + 1)) // stride + 1
    taps = []
    for i in range(kh):
        for j in range(kw):
            sl = xp[:,
                    i * dilation: i * dilation + (ho - 1) * stride + 1: stride,
                    j * dilation: j * dilation + (wo - 1) * stride + 1: stride,
                    :]
            taps.append(sl.reshape(n * ho * wo, c))
    return taps, (n, ho, wo)


@functools.partial(jax.jit, static_argnames=("stride", "dilation"))
def conv3x3(x, w, *, stride=1, dilation=1):
    """3x3 conv (bias=False, padding=dilation). x: NHWC, w: (9, Cin, Cout) tap-major.

    Cin >= 8: 9 shifted matmuls on the padded slab (no im2col HBM materialization);
    stride-2 is obtained by subsampling the stride-1 result (only 2 such convs here).
    """
    n, h, wdim, cin = x.shape
    _, _, cout = w.shape
    pad = dilation

    if cin < 8:
        # Stem (Cin=1): fold the 9 taps into K (K = 9*Cin) -> one tiled matmul.
        taps, (n_, ho, wo) = _extract_patches(x, 3, 3, stride, dilation, pad)
        patches = jnp.concatenate(taps, axis=-1)
        out = _matmul_f32acc(patches, w.reshape(9 * cin, cout))
        return out.reshape(n_, ho, wo, cout)

    hp, wp = h + 2 * pad, wdim + 2 * pad
    mp = n * hp * wp
    max_shift = 2 * dilation * wp + 2 * dilation
    m_rows = _round_up(mp - max_shift, 8)          # output rows in the padded flat space
    extra = m_rows + max_shift - mp                # keep every shifted read in-bounds
    xp = jnp.pad(x, ((0, 0), (pad, pad), (pad, pad), (0, 0)))
    xflat = jnp.pad(xp.reshape(mp, cin), ((0, extra), (0, 0))).astype(_ACT_DTYPE)

    tn = _pick_tile(cout, (256, 128))
    out_core = pl.pallas_call(
        functools.partial(_conv3x3_shift_kernel, wp=wp, dil=dilation, m_rows=m_rows),
        out_shape=jax.ShapeDtypeStruct((m_rows, cout), _ACT_DTYPE),
        grid_spec=pltpu.PrefetchScalarGridSpec(
            num_scalar_prefetch=0,
            grid=(cout // tn,),
            in_specs=[pl.BlockSpec((mp + extra, cin), lambda j: (0, 0)),
                      pl.BlockSpec((9, cin, tn), lambda j: (0, 0, j))],
            out_specs=pl.BlockSpec((m_rows, tn), lambda j: (0, j)),
            scratch_shapes=[pltpu.VMEM((m_rows, tn), jnp.float32)],
        ),
        compiler_params=pltpu.CompilerParams(
            dimension_semantics=("parallel",), vmem_limit_bytes=_VMEM_LIMIT),
    )(xflat, w.astype(_ACT_DTYPE))

    out = jnp.pad(out_core, ((0, mp - m_rows), (0, 0)))
    out = out.reshape(n, hp, wp, cout)[:, :h, :wdim, :]     # crop padded rows/cols
    if stride != 1:
        out = out[:, ::stride, ::stride, :]                 # stride via output subsample
    return out


@functools.partial(jax.jit, static_argnames=("relu",))
def batchnorm_act(x, gamma, beta, *, relu=True, residual=None):
    """Training-mode BatchNorm2d (batch stats, eps=1e-5), fused ReLU and (optionally)
    fused residual add + ReLU for the bottleneck tail. Two-pass tiled pipeline."""
    n, h, wdim, c = x.shape
    m = n * h * wdim
    x2 = x.reshape(m, c)
    tm = _pick_tile(m, (256, 128, 64, 32, 16, 8))
    grid = (m // tm,)
    row_spec = pl.BlockSpec((tm, c), lambda i: (i, 0))
    vec_spec = pl.BlockSpec((1, c), lambda i: (0, 0))

    sums, sqs = pl.pallas_call(
        _bn_stats_kernel,
        out_shape=(jax.ShapeDtypeStruct((1, c), jnp.float32),
                   jax.ShapeDtypeStruct((1, c), jnp.float32)),
        grid_spec=pltpu.PrefetchScalarGridSpec(
            num_scalar_prefetch=0, grid=grid,
            in_specs=[row_spec],
            out_specs=(vec_spec, vec_spec),
        ),
        compiler_params=pltpu.CompilerParams(
            dimension_semantics=("arbitrary",), vmem_limit_bytes=_VMEM_LIMIT),
    )(x2)

    inv_m = 1.0 / m
    if residual is None:
        kern = functools.partial(_bn_apply_kernel, inv_m=inv_m, relu=relu)
        ins = (x2, sums, sqs, gamma, beta)
        in_specs = [row_spec, vec_spec, vec_spec, vec_spec, vec_spec]
    else:
        kern = functools.partial(_bn_apply_add_relu_kernel, inv_m=inv_m)
        ins = (x2, residual.reshape(m, c).astype(x2.dtype), sums, sqs, gamma, beta)
        in_specs = [row_spec, row_spec, vec_spec, vec_spec, vec_spec, vec_spec]

    out = pl.pallas_call(
        kern,
        out_shape=jax.ShapeDtypeStruct((m, c), x.dtype),
        grid_spec=pltpu.PrefetchScalarGridSpec(
            num_scalar_prefetch=0, grid=grid,
            in_specs=in_specs,
            out_specs=row_spec,
        ),
        compiler_params=pltpu.CompilerParams(
            dimension_semantics=("parallel",), vmem_limit_bytes=_VMEM_LIMIT),
        input_output_aliases={0: 0},      # normalize in place over the conv output
    )(*ins)
    return out.reshape(n, h, wdim, c)


@jax.jit
def maxpool_3x3_s2_p1(x):
    """MaxPool2d(3, 2, 1): stride-1 shifted-window max in Pallas on the (-inf)-padded
    slab (read once, no (9,M,C) stack), then a cheap XLA stride-2 subsample."""
    n, h, wdim, c = x.shape
    hp, wp = h + 2, wdim + 2
    mp = n * hp * wp
    max_shift = 2 * wp + 2
    m_rows = _round_up(mp - max_shift, 8)
    extra = m_rows + max_shift - mp
    xp = jnp.pad(x, ((0, 0), (1, 1), (1, 1), (0, 0)), constant_values=-jnp.inf)
    xflat = jnp.pad(xp.reshape(mp, c), ((0, extra), (0, 0)), constant_values=-jnp.inf)

    out_core = pl.pallas_call(
        functools.partial(_pool3x3_shift_kernel, wp=wp, m_rows=m_rows),
        out_shape=jax.ShapeDtypeStruct((m_rows, c), x.dtype),
        compiler_params=pltpu.CompilerParams(vmem_limit_bytes=_VMEM_LIMIT),
    )(xflat)

    out = jnp.pad(out_core, ((0, mp - m_rows), (0, 0)))
    out = out.reshape(n, hp, wp, c)[:, :h, :wdim, :]
    return out[:, ::2, ::2, :]


# -----------------------------------------------------------------------------
# Parameter construction (mirrors ResNet.__init__ / _make_layer bookkeeping)
# -----------------------------------------------------------------------------

def _conv_init(key, kh, kw, cin, cout):
    n = kh * kw * cout
    w = jax.random.normal(key, (kh, kw, cin, cout), jnp.float32) * math.sqrt(2.0 / n)
    if kh == 1 and kw == 1:
        return w.reshape(cin, cout).astype(_ACT_DTYPE)
    return w.reshape(kh * kw, cin, cout).astype(_ACT_DTYPE)


def _bn_init(c):
    return jnp.ones((1, c), jnp.float32), jnp.zeros((1, c), jnp.float32)


def build_resnet_params(key, dim_in=1, layers=(3, 4, 23, 3)):
    kit = iter(jax.random.split(key, 4096))
    state = {"current_stride": 4, "current_dilation": 1, "output_stride": 32, "inplanes": 64}

    params = {}
    params["conv1_w"] = _conv_init(next(kit), 3, 3, dim_in, 64)
    params["bn1_g"], params["bn1_b"] = _bn_init(64)

    def make_bottleneck(inplanes, planes, stride, dilation, with_downsample):
        p = {"stride": stride, "dilation": dilation}
        p["conv1_w"] = _conv_init(next(kit), 1, 1, inplanes, planes)
        p["bn1_g"], p["bn1_b"] = _bn_init(planes)
        p["conv2_w"] = _conv_init(next(kit), 3, 3, planes, planes)
        p["bn2_g"], p["bn2_b"] = _bn_init(planes)
        p["conv3_w"] = _conv_init(next(kit), 1, 1, planes, planes * _EXPANSION)
        p["bn3_g"], p["bn3_b"] = _bn_init(planes * _EXPANSION)
        if with_downsample:
            p["ds_w"] = _conv_init(next(kit), 1, 1, inplanes, planes * _EXPANSION)
            p["ds_g"], p["ds_b"] = _bn_init(planes * _EXPANSION)
            p["ds_stride"] = stride
        return p

    def make_layer(planes, blocks, stride=1):
        with_ds = False
        if stride != 1 or state["inplanes"] != planes * _EXPANSION:
            if state["current_stride"] == state["output_stride"]:
                state["current_dilation"] = state["current_dilation"] * stride
                stride = 1
            else:
                state["current_stride"] = state["current_stride"] * stride
            with_ds = True
        blks = [make_bottleneck(state["inplanes"], planes, stride,
                                state["current_dilation"], with_ds)]
        state["inplanes"] = planes * _EXPANSION
        for _ in range(1, blocks):
            blks.append(make_bottleneck(state["inplanes"], planes, 1,
                                        state["current_dilation"], False))
        return blks

    params["layer1"] = make_layer(64, layers[0], stride=1)
    params["layer2"] = make_layer(128, layers[1], stride=2)
    params["layer3"] = make_layer(256, layers[2], stride=2)  # `dilation` arg of _make_layer is unused in the torch code
    params["layer4"] = make_layer(256, layers[3], stride=1)
    return params


# -----------------------------------------------------------------------------
# Forward pass
# -----------------------------------------------------------------------------

def bottleneck_forward(x, p):
    out = conv1x1(x, p["conv1_w"])
    out = batchnorm_act(out, p["bn1_g"], p["bn1_b"], relu=True)
    out = conv3x3(out, p["conv2_w"], stride=p["stride"], dilation=p["dilation"])
    out = batchnorm_act(out, p["bn2_g"], p["bn2_b"], relu=True)
    out = conv1x1(out, p["conv3_w"])
    if "ds_w" in p:
        res = conv1x1(x, p["ds_w"], stride=p["ds_stride"])
        res = batchnorm_act(res, p["ds_g"], p["ds_b"], relu=False)
    else:
        res = x
    # bn3 + residual add + ReLU fused in one Pallas kernel.
    return batchnorm_act(out, p["bn3_g"], p["bn3_b"], relu=True, residual=res)


def resnet_forward(x_nchw, params):
    # NCHW (PyTorch) -> NHWC for TPU kernels; bf16 activations throughout.
    x = jnp.transpose(x_nchw, (0, 2, 3, 1)).astype(_ACT_DTYPE)

    x = conv3x3(x, params["conv1_w"], stride=1, dilation=1)
    x1 = batchnorm_act(x, params["bn1_g"], params["bn1_b"], relu=True)
    x2 = maxpool_3x3_s2_p1(x1)

    for blk in params["layer1"]:
        x2 = bottleneck_forward(x2, blk)
    x3 = x2
    for blk in params["layer2"]:
        x3 = bottleneck_forward(x3, blk)
    x4 = x3
    for blk in params["layer3"]:
        x4 = bottleneck_forward(x4, blk)
    x5 = x4
    for blk in params["layer4"]:
        x5 = bottleneck_forward(x5, blk)

    to_nchw = lambda t: jnp.transpose(t, (0, 3, 1, 2)).astype(jnp.float32)
    return to_nchw(x2), to_nchw(x3), to_nchw(x5)


# -----------------------------------------------------------------------------
# Main
# -----------------------------------------------------------------------------

if __name__ == "__main__":
    key = jax.random.PRNGKey(0)
    pkey, xkey = jax.random.split(key)

    params = build_resnet_params(pkey, dim_in=1, layers=(3, 4, 23, 3))

    # Small input consistent with the module: batch=2, dim_in=1 channel, 16x16 spatial (NCHW).
    x = jax.random.normal(xkey, (2, 1, 16, 16), jnp.float32)

    x2, x3, x5 = resnet_forward(x, params)
    jax.block_until_ready((x2, x3, x5))

    assert x2.shape == (2, 256, 8, 8), x2.shape
    assert x3.shape == (2, 512, 4, 4), x3.shape
    assert x5.shape == (2, 1024, 2, 2), x5.shape
    assert jnp.all(jnp.isfinite(x2)) and jnp.all(jnp.isfinite(x3)) and jnp.all(jnp.isfinite(x5))

    print("KERNEL_OK")
</pallas_src>

<mosaic_0001>
module attributes {stable_mosaic.version = 11 : i64} {
  func.func @_matmul_kernel(%arg0: i32, %arg1: i32, %arg2: i32, %arg3: memref<256x9xbf16, #tpu.memory_space<vmem>>, %arg4: memref<9x64xbf16, #tpu.memory_space<vmem>>, %arg5: memref<256x64xbf16, #tpu.memory_space<vmem>>, %arg6: memref<256x64xf32, #tpu.memory_space<vmem>>) attributes {dimension_semantics = [#tpu.dimension_semantics<parallel>, #tpu.dimension_semantics<parallel>, #tpu.dimension_semantics<arbitrary>], iteration_bounds = array<i64: 2, 1, 1>, scalar_prefetch = 0 : i64, scratch_operands = 1 : i64, tpu.core_type = #tpu.core_type<tc>, window_params = [{transform_indices = @transform_0, window_bounds = array<i64: 256, 9>}, {transform_indices = @transform_1, window_bounds = array<i64: 9, 64>}, {transform_indices = @transform_2, window_bounds = array<i64: 256, 64>}]} {
    %c0_i32 = arith.constant 0 : i32
    %0 = arith.cmpi eq, %arg2, %c0_i32 : i32
    %1 = arith.extui %0 : i1 to i32
    %c0_i32_0 = arith.constant 0 : i32
    %2 = arith.cmpi ne, %1, %c0_i32_0 : i32
    scf.if %2 {
      %cst_10 = arith.constant 0.000000e+00 : f32
      %12 = vector.broadcast %cst_10 : f32 to vector<256x64xf32>
      %c0_11 = arith.constant 0 : index
      %c0_12 = arith.constant 0 : index
      %13 = vector.load %arg6[%c0_11, %c0_12] : memref<256x64xf32, #tpu.memory_space<vmem>>, vector<256x64xf32>
      tpu.vector_store %arg6[%c0_11, %c0_12], %12 {strides = array<i32>} : memref<256x64xf32, #tpu.memory_space<vmem>>, vector<256x64xf32>,
    } else {
    }
    %c0 = arith.constant 0 : index
    %c0_1 = arith.constant 0 : index
    %3 = vector.load %arg6[%c0, %c0_1] : memref<256x64xf32, #tpu.memory_space<vmem>>, vector<256x64xf32>
    %c0_2 = arith.constant 0 : index
    %c0_3 = arith.constant 0 : index
    %4 = vector.load %arg3[%c0_2, %c0_3] : memref<256x9xbf16, #tpu.memory_space<vmem>>, vector<256x9xbf16>
    %c0_4 = arith.constant 0 : index
    %c0_5 = arith.constant 0 : index
    %5 = vector.load %arg4[%c0_4, %c0_5] : memref<9x64xbf16, #tpu.memory_space<vmem>>, vector<9x64xbf16>
    %cst = arith.constant dense<0.000000e+00> : vector<256x64xf32>
    %6 = tpu.matmul %4, %5, %cst {dimension_numbers = #tpu.dot_dimension_numbers<[1], [0], [0], [1], [0, 0, 1, 1], [], []>} : vector<256x9xbf16>, vector<9x64xbf16>, vector<256x64xf32> -> vector<256x64xf32>
    %7 = arith.addf %3, %6 : vector<256x64xf32>
    %c0_6 = arith.constant 0 : index
    %c0_7 = arith.constant 0 : index
    %8 = vector.load %arg6[%c0_6, %c0_7] : memref<256x64xf32, #tpu.memory_space<vmem>>, vector<256x64xf32>
    tpu.vector_store %arg6[%c0_6, %c0_7], %7 {strides = array<i32>} : memref<256x64xf32, #tpu.memory_space<vmem>>, vector<256x64xf32>,
    %c0_i32_8 = arith.constant 0 : i32
    %9 = arith.cmpi eq, %arg2, %c0_i32_8 : i32
    %10 = arith.extui %9 : i1 to i32
    %c0_i32_9 = arith.constant 0 : i32
    %11 = arith.cmpi ne, %10, %c0_i32_9 : i32
    scf.if %11 {
      %c0_10 = arith.constant 0 : index
      %c0_11 = arith.constant 0 : index
      %12 = vector.load %arg6[%c0_10, %c0_11] : memref<256x64xf32, #tpu.memory_space<vmem>>, vector<256x64xf32>
      %13 = arith.truncf %12 : vector<256x64xf32> to vector<256x64xbf16>
      %c0_12 = arith.constant 0 : index
      %c0_13 = arith.constant 0 : index
      %14 = vector.load %arg5[%c0_12, %c0_13] : memref<256x64xbf16, #tpu.memory_space<vmem>>, vector<256x64xbf16>
      tpu.vector_store %arg5[%c0_12, %c0_13], %13 {strides = array<i32>} : memref<256x64xbf16, #tpu.memory_space<vmem>>, vector<256x64xbf16>,
    } else {
    }
    return
  }
  func.func @transform_0(%arg0: i32, %arg1: i32, %arg2: i32) -> (i32, i32) {
    %c0_i32 = arith.constant 0 : i32
    return %arg0, %arg2 : i32, i32
  }
  func.func @transform_1(%arg0: i32, %arg1: i32, %arg2: i32) -> (i32, i32) {
    %c0_i32 = arith.constant 0 : i32
    return %arg2, %arg1 : i32, i32
  }
  func.func @transform_2(%arg0: i32, %arg1: i32, %arg2: i32) -> (i32, i32) {
    %c0_i32 = arith.constant 0 : i32
    return %arg0, %arg1 : i32, i32
  }
}

</mosaic_0001>

<llo_original>
// kernel: conv3x3.1
$region0: #{conv3x3.1}
  #allocation0 [shape = 'u32[]', space=smem, size = 0x4, offset = 0x4, fixed_abs, tag = 'smem constant byte address 0x4 - core index']
  #allocation1 [shape = 'u32[144,128]{1,0:T(1,128)}', space=vmem, size = 0x12000, scoped, tag = 'internal scratch']
  #allocation2 [shape = 'f32[256,64]{1,0:T(8,128)}', space=vmem, size = 0x20000, scoped, tag = 'scratch operand']
  %s0 = inlined_call_operand.vmem [shape: bf16[512,9], index: 0, kind: input, shape index: {}]
  %s1 = inlined_call_operand.vmem [shape: bf16[9,64], index: 1, kind: input, shape index: {}]
  %s2 = inlined_call_operand.hbm [shape: bf16[512,64], index: 2, kind: output, shape index: {}]
  %s3 = sld [smem:[#allocation0]]
  $region49: #{conv3x3.1} parent=0
    _
  %s5 = ssub.s32 1, %s3
  %s6 = scalar_select 0, %s5, %s3
  $region1: #{conv3x3.1} parent=0
    #allocation3 [shape = 'u8[131072]{0}', space=vmem, size = 0x20000, scoped, tag = 'output window, operand 0']
    #allocation4 [shape = 's32[2]{0}', space=sflag, size = 0x8, scoped, tag = 'scoped memory for conv3x3.1']
    %7 = vsyncpa [#allocation4], 0
    %s8 = scalar_lea.sflag [#allocation4], 1
    %9 = vsyncpa %s8, 0
    loop: start=0, step=1, limit=4
    $region2: #{conv3x3.1} parent=1 // loop_pre_header
      _
    $region3: #{conv3x3.1} parent=1 // loop_header
      %s11 = sphi 0, %s15
      %p12 = scmp.ge.s32.totalorder %s11, 4
      %s18 = sphi 0, %s37
      %s19 = sphi 0, %s33
      %s20 = sphi 0, %s29
      %s21 = sphi 0, %s18
      %s22 = sphi 0, %s19
      %s23 = sphi 0, %s20
      %s24 = sphi 0, %s21
      %s25 = sphi 0, %s22
      %s26 = sphi 0, %s23
      %s42 = sphi 0, %s44
      %s45 = sphi 0, %s42
      %s46 = sphi 0, %s45
      %s62 = sphi 0, %s46
      %s70 = sphi 0, %s72
      %s73 = sphi 0, %s70
      %s74 = sphi 0, %s73
      %s90 = sphi 0, %s74
      %s98 = sphi 0, %s100
      %s101 = sphi 0, %s98
      %s102 = sphi 0, %s101
      %s118 = sphi 0, %s102
    $region4: #{conv3x3.1} parent=1 // loop_header_branch
      %14 = sbr.rel (%p12) target = $region8
    $region5: #{conv3x3.1} parent=1 // loop_body
      %s16 = ssub.s32 %s11, 1
      %s17 = ssub.s32 %s11, 2
      %s27 = sadd.s32 1, %s20
      %p28 = scmp.ge.s32.totalorder %s27, 1
      %s29 = scalar_select %p28, 0, %s27
      %s30 = sadd.s32 1, %s19
      %s31 = scalar_select %p28, %s30, %s19
      %p32 = scmp.ge.s32.totalorder %s31, 1
      %s33 = scalar_select %p32, 0, %s31
      %s34 = sadd.s32 1, %s18
      %s35 = scalar_select %p32, %s34, %s18
      %p36 = scmp.ge.s32.totalorder %s35, 2
      %s37 = scalar_select %p36, 0, %s35
      %s38 = ssub.s32 %s18, %s37
      %s39 = ssub.s32 %s20, %s29
      %s40 = sor.u32 %s38, %s39
      %p41 = scmp.eq.s32.totalorder %s40, 0
      %s43 = sadd.s32 %s42, 1
      %s44 = scalar_select %p41, %s42, %s43
      %p47 = pneg %p41
      %p48 = scmp.eq.s32.totalorder %s11, 1
      %p49 = por %p47, %p48
      %p50 = scmp.ne.s32.totalorder %s42, %s45
      %p51 = scmp.eq.s32.totalorder %s11, 0
      %p52 = por %p50, %p51
      %p53 = scmp.ne.s32.totalorder %s42, %s45
      %p54 = scmp.eq.s32.totalorder %s16, 1
      %p55 = por %p53, %p54
      %p56 = scmp.ne.s32.totalorder %s45, %s46
      %p57 = scmp.eq.s32.totalorder %s16, 0
      %p58 = por %p56, %p57
      %p59 = scmp.ne.s32.totalorder %s45, %s46
      %p60 = scmp.eq.s32.totalorder %s17, 1
      %p61 = por %p59, %p60
      %p63 = scmp.ne.s32.totalorder %s46, %s62
      %p64 = scmp.eq.s32.totalorder %s17, 0
      %p65 = por %p63, %p64
      %s66 = ssub.s32 %s20, %s29
      %s67 = ssub.s32 %s19, %s33
      %s68 = sor.u32 %s66, %s67
      %p69 = scmp.eq.s32.totalorder %s68, 0
      %s71 = sadd.s32 %s70, 1
      %s72 = scalar_select %p69, %s70, %s71
      %p75 = pneg %p69
      %p76 = scmp.eq.s32.totalorder %s11, 1
      %p77 = por %p75, %p76
      %p78 = scmp.ne.s32.totalorder %s70, %s73
      %p79 = scmp.eq.s32.totalorder %s11, 0
      %p80 = por %p78, %p79
      %p81 = scmp.ne.s32.totalorder %s70, %s73
      %p82 = scmp.eq.s32.totalorder %s16, 1
      %p83 = por %p81, %p82
      %p84 = scmp.ne.s32.totalorder %s73, %s74
      %p85 = scmp.eq.s32.totalorder %s16, 0
      %p86 = por %p84, %p85
      %p87 = scmp.ne.s32.totalorder %s73, %s74
      %p88 = scmp.eq.s32.totalorder %s17, 1
      %p89 = por %p87, %p88
      %p91 = scmp.ne.s32.totalorder %s74, %s90
      %p92 = scmp.eq.s32.totalorder %s17, 0
      %p93 = por %p91, %p92
      %s94 = ssub.s32 %s18, %s37
      %s95 = ssub.s32 %s19, %s33
      %s96 = sor.u32 %s94, %s95
      %p97 = scmp.eq.s32.totalorder %s96, 0
      %s99 = sadd.s32 %s98, 1
      %s100 = scalar_select %p97, %s98, %s99
      %p103 = pneg %p97
      %p104 = scmp.eq.s32.totalorder %s11, 1
      %p105 = por %p103, %p104
      %p106 = scmp.ne.s32.totalorder %s98, %s101
      %p107 = scmp.eq.s32.totalorder %s11, 0
      %p108 = por %p106, %p107
      %p109 = scmp.ne.s32.totalorder %s98, %s101
      %p110 = scmp.eq.s32.totalorder %s16, 1
      %p111 = por %p109, %p110
      %p112 = scmp.ne.s32.totalorder %s101, %s102
      %p113 = scmp.eq.s32.totalorder %s16, 0
      %p114 = por %p112, %p113
      %p115 = scmp.ne.s32.totalorder %s101, %s102
      %p116 = scmp.eq.s32.totalorder %s17, 1
      %p117 = por %p115, %p116
      %p119 = scmp.ne.s32.totalorder %s102, %s118
      %p120 = scmp.eq.s32.totalorder %s17, 0
      %p121 = por %p119, %p120
      %p122 = scmp.le.s32.totalorder 1, %s11
      %p123 = scmp.lt.s32.totalorder %s11, 3
      %p124 = pnand %p122, %p123
      %p125 = pneg %p124
      // Predicated region
      $region9: #{conv3x3.1} parent=5 // pred_check
        _
      $region10: #{conv3x3.1} parent=5 // pred_check_branch
        %127 = sbr.rel (%p124) target = $region12
      $region11: #{conv3x3.1} parent=5 // pred_region
        %s128 = ssub.s32 %s11, 1
        // Predicated region
        $region13: #{conv3x3.1} parent=11 // pred_check
          %p129 = pneg %p86
        $region14: #{conv3x3.1} parent=11 // pred_check_branch
          %131 = sbr.rel (%p129) target = $region16
        $region15: #{conv3x3.1} parent=11 // pred_region
          %s132 = smul.u32 2, %s23
          %p133 = scmp.lt.s32.totalorder %s132, 1
          %s134 = scalar_select %p133, %s132, 1
          %p135 = scmp.lt.s32.totalorder %s22, 0
          %s136 = scalar_select %p135, %s22, 0
          %s137 = sadd.s32 %s136, %s134
          %s138 = smul.addr %s137, 4
          %s139 = scalar_lea.vmem %s1, %s138
          %s140 = smul.u32 2, %s23
        $region16: #{conv3x3.1} parent=11 // pred_fallthru
          _
      $region12: #{conv3x3.1} parent=5 // pred_fallthru
        _
      %p141 = scmp.lt.s32.totalorder %s11, 2
      // Predicated region
      $region17: #{conv3x3.1} parent=5 // pred_check
        %p142 = pneg %p141
      $region18: #{conv3x3.1} parent=5 // pred_check_branch
        %144 = sbr.rel (%p142) target = $region20
      $region19: #{conv3x3.1} parent=5 // pred_region
        // Predicated region
        $region21: #{conv3x3.1} parent=19 // pred_check
          %p145 = pneg %p52
        $region22: #{conv3x3.1} parent=19 // pred_check_branch
          %147 = sbr.rel (%p145) target = $region24
        $region23: #{conv3x3.1} parent=19 // pred_region
          %s148 = smul.u32 32, %s18
          %p149 = scmp.lt.s32.totalorder %s148, 63
          %s150 = scalar_select %p149, %s148, 63
          %p151 = scmp.lt.s32.totalorder %s20, 0
          %s152 = scalar_select %p151, %s20, 0
          %s153 = sadd.s32 %s152, %s150
          %s154 = smul.addr %s153, 4
          %s155 = scalar_lea.vmem %s0, %s154
          %s156 = smul.u32 32, %s18
        $region24: #{conv3x3.1} parent=19 // pred_fallthru
          _
      $region20: #{conv3x3.1} parent=5 // pred_fallthru
        _
      %p157 = scmp.le.s32.totalorder 1, %s11
      %p158 = scmp.lt.s32.totalorder %s11, 3
      %p159 = pnand %p157, %p158
      %p160 = pneg %p159
      // Predicated region
      $region25: #{conv3x3.1} parent=5 // pred_check
        _
      $region26: #{conv3x3.1} parent=5 // pred_check_branch
        %162 = sbr.rel (%p159) target = $region28
      $region27: #{conv3x3.1} parent=5 // pred_region
        %s163 = ssub.s32 %s11, 1
        %s164 = smul.u32 32, %s21
        %p165 = scmp.lt.s32.totalorder %s164, 63
        %s166 = scalar_select %p165, %s164, 63
        %p167 = scmp.lt.s32.totalorder %s23, 0
        %s168 = scalar_select %p167, %s23, 0
        %s169 = sadd.s32 %s168, %s166
        %s170 = smul.addr %s169, 4
        %s171 = scalar_lea.vmem %s0, %s170
        %p172 = pneg %p58
        %p173 = pneg %p55
        %s174 = smul.u32 2, %s23
        %p175 = scmp.lt.s32.totalorder %s174, 1
        %s176 = scalar_select %p175, %s174, 1
        %p177 = scmp.lt.s32.totalorder %s22, 0
        %s178 = scalar_select %p177, %s22, 0
        %s179 = sadd.s32 %s178, %s176
        %s180 = smul.addr %s179, 4
        %s181 = scalar_lea.vmem %s1, %s180
        %p182 = pneg %p86
        %p183 = pneg %p83
        %p184 = pneg %p114
        %p185 = pneg %p111
        %s186 = sand.u32 %s101, 1
        %s187 = scalar_lea.sflag [#allocation4], %s186
        %s188 = sand.u32 %s101, 1
        %s189 = smul.addr %s188, 128
        %s190 = scalar_lea.vmem [#allocation3], %s189
        %s191 = smul.u32 32, %s21
        %p192 = scmp.lt.s32.totalorder %s191, 63
        %s193 = scalar_select %p192, %s191, 63
        %p194 = scmp.lt.s32.totalorder %s23, 0
        %s195 = scalar_select %p194, %s23, 0
        %s196 = sadd.s32 %s195, %s193
        %s197 = smul.addr %s196, 4
        %s198 = scalar_lea.vmem %s0, %s197
        %s199 = smul.u32 32, %s21
        %s200 = smul.u32 2, %s23
        %p201 = scmp.lt.s32.totalorder %s200, 1
        %s202 = scalar_select %p201, %s200, 1
        %p203 = scmp.lt.s32.totalorder %s22, 0
        %s204 = scalar_select %p203, %s22, 0
        %s205 = sadd.s32 %s204, %s202
        %s206 = smul.addr %s205, 4
        %s207 = scalar_lea.vmem %s1, %s206
        %s208 = smul.u32 2, %s23
        %s209 = smul.u32 32, %s21
        %p211 = scmp.eq.s32.totalorder %s23, 0
        // Predicated region
        $region29: #{conv3x3.1} parent=27 // pred_check
          %p212 = pneg %p211
        $region30: #{conv3x3.1} parent=27 // pred_check_branch
          %214 = sbr.rel (%p212) target = $region32
        $region31: #{conv3x3.1} parent=27 // pred_region
          %vm215 = vcmask 523264
          %216 = vst.msk [vmem:[#allocation2] sm:$0xff] %vm215, 0.0
          %217 = vst.msk [vmem:[#allocation2 + $0x8] sm:$0xff] %vm215, 0.0
          %218 = vst.msk [vmem:[#allocation2 + $0x10] sm:$0xff] %vm215, 0.0
          %219 = vst.msk [vmem:[#allocation2 + $0x18] sm:$0xff] %vm215, 0.0
          %220 = vst.msk [vmem:[#allocation2 + $0x20] sm:$0xff] %vm215, 0.0
          %221 = vst.msk [vmem:[#allocation2 + $0x28] sm:$0xff] %vm215, 0.0
          %222 = vst.msk [vmem:[#allocation2 + $0x30] sm:$0xff] %vm215, 0.0
          %223 = vst.msk [vmem:[#allocation2 + $0x38] sm:$0xff] %vm215, 0.0
          %224 = vst.msk [vmem:[#allocation2 + $0x40] sm:$0xff] %vm215, 0.0
          %225 = vst.msk [vmem:[#allocation2 + $0x48] sm:$0xff] %vm215, 0.0
          %226 = vst.msk [vmem:[#allocation2 + $0x50] sm:$0xff] %vm215, 0.0
          %227 = vst.msk [vmem:[#allocation2 + $0x58] sm:$0xff] %vm215, 0.0
          %228 = vst.msk [vmem:[#allocation2 + $0x60] sm:$0xff] %vm215, 0.0
          %229 = vst.msk [vmem:[#allocation2 + $0x68] sm:$0xff] %vm215, 0.0
          %230 = vst.msk [vmem:[#allocation2 + $0x70] sm:$0xff] %vm215, 0.0
          %231 = vst.msk [vmem:[#allocation2 + $0x78] sm:$0xff] %vm215, 0.0
          %232 = vst.msk [vmem:[#allocation2 + $0x80] sm:$0xff] %vm215, 0.0
          %233 = vst.msk [vmem:[#allocation2 + $0x88] sm:$0xff] %vm215, 0.0
          %234 = vst.msk [vmem:[#allocation2 + $0x90] sm:$0xff] %vm215, 0.0
          %235 = vst.msk [vmem:[#allocation2 + $0x98] sm:$0xff] %vm215, 0.0
          %236 = vst.msk [vmem:[#allocation2 + $0xa0] sm:$0xff] %vm215, 0.0
          %237 = vst.msk [vmem:[#allocation2 + $0xa8] sm:$0xff] %vm215, 0.0
          %238 = vst.msk [vmem:[#allocation2 + $0xb0] sm:$0xff] %vm215, 0.0
          %239 = vst.msk [vmem:[#allocation2 + $0xb8] sm:$0xff] %vm215, 0.0
          %240 = vst.msk [vmem:[#allocation2 + $0xc0] sm:$0xff] %vm215, 0.0
          %241 = vst.msk [vmem:[#allocation2 + $0xc8] sm:$0xff] %vm215, 0.0
          %242 = vst.msk [vmem:[#allocation2 + $0xd0] sm:$0xff] %vm215, 0.0
          %243 = vst.msk [vmem:[#allocation2 + $0xd8] sm:$0xff] %vm215, 0.0
          %244 = vst.msk [vmem:[#allocation2 + $0xe0] sm:$0xff] %vm215, 0.0
          %245 = vst.msk [vmem:[#allocation2 + $0xe8] sm:$0xff] %vm215, 0.0
          %246 = vst.msk [vmem:[#allocation2 + $0xf0] sm:$0xff] %vm215, 0.0
          %247 = vst.msk [vmem:[#allocation2 + $0xf8] sm:$0xff] %vm215, 0.0
        $region32: #{conv3x3.1} parent=27 // pred_fallthru
          _
        %v248 = vld [vmem:[#allocation2] sm:$0xff]
        %v249 = vld [vmem:[#allocation2 + $0x8] sm:$0xff]
        %v250 = vld [vmem:[#allocation2 + $0x10] sm:$0xff]
        %v251 = vld [vmem:[#allocation2 + $0x18] sm:$0xff]
        %v252 = vld [vmem:[#allocation2 + $0x20] sm:$0xff]
        %v253 = vld [vmem:[#allocation2 + $0x28] sm:$0xff]
        %v254 = vld [vmem:[#allocation2 + $0x30] sm:$0xff]
        %v255 = vld [vmem:[#allocation2 + $0x38] sm:$0xff]
        %v256 = vld [vmem:[#allocation2 + $0x40] sm:$0xff]
        %v257 = vld [vmem:[#allocation2 + $0x48] sm:$0xff]
        %v258 = vld [vmem:[#allocation2 + $0x50] sm:$0xff]
        %v259 = vld [vmem:[#allocation2 + $0x58] sm:$0xff]
        %v260 = vld [vmem:[#allocation2 + $0x60] sm:$0xff]
        %v261 = vld [vmem:[#allocation2 + $0x68] sm:$0xff]
        %v262 = vld [vmem:[#allocation2 + $0x70] sm:$0xff]
        %v263 = vld [vmem:[#allocation2 + $0x78] sm:$0xff]
        %v264 = vld [vmem:[#allocation2 + $0x80] sm:$0xff]
        %v265 = vld [vmem:[#allocation2 + $0x88] sm:$0xff]
        %v266 = vld [vmem:[#allocation2 + $0x90] sm:$0xff]
        %v267 = vld [vmem:[#allocation2 + $0x98] sm:$0xff]
        %v268 = vld [vmem:[#allocation2 + $0xa0] sm:$0xff]
        %v269 = vld [vmem:[#allocation2 + $0xa8] sm:$0xff]
        %v270 = vld [vmem:[#allocation2 + $0xb0] sm:$0xff]
        %v271 = vld [vmem:[#allocation2 + $0xb8] sm:$0xff]
        %v272 = vld [vmem:[#allocation2 + $0xc0] sm:$0xff]
        %v273 = vld [vmem:[#allocation2 + $0xc8] sm:$0xff]
        %v274 = vld [vmem:[#allocation2 + $0xd0] sm:$0xff]
        %v275 = vld [vmem:[#allocation2 + $0xd8] sm:$0xff]
        %v276 = vld [vmem:[#allocation2 + $0xe0] sm:$0xff]
        %v277 = vld [vmem:[#allocation2 + $0xe8] sm:$0xff]
        %v278 = vld [vmem:[#allocation2 + $0xf0] sm:$0xff]
        %v279 = vld [vmem:[#allocation2 + $0xf8] sm:$0xff]
        %v280 = vld [vmem:[%s198] sm:$0xf]
        %v281 = vld [vmem:[%s198 + $0x4] sm:$0xf]
        %v282 = vld [vmem:[%s198 + $0x8] sm:$0xf]
        %v283 = vld [vmem:[%s198 + $0xc] sm:$0xf]
        %v284 = vld [vmem:[%s198 + $0x10] sm:$0xf]
        %v285 = vld [vmem:[%s198 + $0x14] sm:$0xf]
        %v286 = vld [vmem:[%s198 + $0x18] sm:$0xf]
        %v287 = vld [vmem:[%s198 + $0x1c] sm:$0xf]
        %v288 = vld [vmem:[%s198 + $0x20] sm:$0xf]
        %v289 = vld [vmem:[%s198 + $0x24] sm:$0xf]
        %v290 = vld [vmem:[%s198 + $0x28] sm:$0xf]
        %v291 = vld [vmem:[%s198 + $0x2c] sm:$0xf]
        %v292 = vld [vmem:[%s198 + $0x30] sm:$0xf]
        %v293 = vld [vmem:[%s198 + $0x34] sm:$0xf]
        %v294 = vld [vmem:[%s198 + $0x38] sm:$0xf]
        %v295 = vld [vmem:[%s198 + $0x3c] sm:$0xf]
        %v296 = vld [vmem:[%s198 + $0x40] sm:$0xf]
        %v297 = vld [vmem:[%s198 + $0x44] sm:$0xf]
        %v298 = vld [vmem:[%s198 + $0x48] sm:$0xf]
        %v299 = vld [vmem:[%s198 + $0x4c] sm:$0xf]
        %v300 = vld [vmem:[%s198 + $0x50] sm:$0xf]
        %v301 = vld [vmem:[%s198 + $0x54] sm:$0xf]
        %v302 = vld [vmem:[%s198 + $0x58] sm:$0xf]
        %v303 = vld [vmem:[%s198 + $0x5c] sm:$0xf]
        %v304 = vld [vmem:[%s198 + $0x60] sm:$0xf]
        %v305 = vld [vmem:[%s198 + $0x64] sm:$0xf]
        %v306 = vld [vmem:[%s198 + $0x68] sm:$0xf]
        %v307 = vld [vmem:[%s198 + $0x6c] sm:$0xf]
        %v308 = vld [vmem:[%s198 + $0x70] sm:$0xf]
        %v309 = vld [vmem:[%s198 + $0x74] sm:$0xf]
        %v310 = vld [vmem:[%s198 + $0x78] sm:$0xf]
        %v311 = vld [vmem:[%s198 + $0x7c] sm:$0xf]
        %v312 = vld [vmem:[%s207] sm:$0xf]
        %v313 = vld [vmem:[%s207 + $0x4] sm:$0x1]
        %v346 = vunpack.c.l.b16 %v280
        %v347 = vunpack.c.l.b16 %v281
        %v348 = vunpack.c.l.b16 %v282
        %v349 = vunpack.c.l.b16 %v283
        %v350 = vunpack.c.l.b16 %v284
        %v351 = vunpack.c.l.b16 %v285
        %v352 = vunpack.c.l.b16 %v286
        %v353 = vunpack.c.l.b16 %v287
        %v354 = vunpack.c.l.b16 %v288
        %v355 = vunpack.c.l.b16 %v289
        %v356 = vunpack.c.l.b16 %v290
        %v357 = vunpack.c.l.b16 %v291
        %v358 = vunpack.c.l.b16 %v292
        %v359 = vunpack.c.l.b16 %v293
        %v360 = vunpack.c.l.b16 %v294
        %v361 = vunpack.c.l.b16 %v295
        %v362 = vunpack.c.l.b16 %v296
        %v363 = vunpack.c.l.b16 %v297
        %v364 = vunpack.c.l.b16 %v298
        %v365 = vunpack.c.l.b16 %v299
        %v366 = vunpack.c.l.b16 %v300
        %v367 = vunpack.c.l.b16 %v301
        %v368 = vunpack.c.l.b16 %v302
        %v369 = vunpack.c.l.b16 %v303
        %v370 = vunpack.c.l.b16 %v304
        %v371 = vunpack.c.l.b16 %v305
        %v372 = vunpack.c.l.b16 %v306
        %v373 = vunpack.c.l.b16 %v307
        %v374 = vunpack.c.l.b16 %v308
        %v375 = vunpack.c.l.b16 %v309
        %v376 = vunpack.c.l.b16 %v310
        %v377 = vunpack.c.l.b16 %v311
        %v378 = vpack.c.b16 %v347, %v346
        %v379 = vpack.c.b16 %v349, %v348
        %v380 = vpack.c.b16 %v351, %v350
        %v381 = vpack.c.b16 %v353, %v352
        %v382 = vpack.c.b16 %v355, %v354
        %v383 = vpack.c.b16 %v357, %v356
        %v384 = vpack.c.b16 %v359, %v358
        %v385 = vpack.c.b16 %v361, %v360
        %v386 = vpack.c.b16 %v363, %v362
        %v387 = vpack.c.b16 %v365, %v364
        %v388 = vpack.c.b16 %v367, %v366
        %v389 = vpack.c.b16 %v369, %v368
        %v390 = vpack.c.b16 %v371, %v370
        %v391 = vpack.c.b16 %v373, %v372
        %v392 = vpack.c.b16 %v375, %v374
        %v393 = vpack.c.b16 %v377, %v376
        %v396 = vunpack.c.l.b16 %v312
        %v397 = vunpack.c.l.b16 %v313
        %v398 = vpack.c.b16 %v397, %v396
        %vm399 = vcmask 72704
        %v401 = vsel %vm399, %v378, 0
        %v404 = vsel %vm399, %v379, 0
        %v407 = vsel %vm399, %v380, 0
        %v410 = vsel %vm399, %v381, 0
        %v413 = vsel %vm399, %v382, 0
        %v416 = vsel %vm399, %v383, 0
        %v419 = vsel %vm399, %v384, 0
        %v422 = vsel %vm399, %v385, 0
        %v425 = vsel %vm399, %v386, 0
        %v428 = vsel %vm399, %v387, 0
        %v431 = vsel %vm399, %v388, 0
        %v434 = vsel %vm399, %v389, 0
        %v437 = vsel %vm399, %v390, 0
        %v440 = vsel %vm399, %v391, 0
        %v443 = vsel %vm399, %v392, 0
        %v446 = vsel %vm399, %v393, 0
        %vm448 = vcmask 1043456
        %vm449 = vcmask 1044480
        %v450 = vsel %vm448, 4294967295, 65535
        %v451 = vsel %vm449, %v450, 0
        %v453 = vand.u32 %v398, %v451
        %455 = vmatprep.subr.bf16.mxu0 0
        %456 = vmatpush1.bf16.msra.mxu0 0
        %457 = vmatprep.subr.bf16.mxu0 0
        %458 = vmatpush1.bf16.msra.mxu0 0
        %459 = vmatprep.subr.bf16.mxu0 0
        %460 = vmatpush1.bf16.msra.mxu0 0
        %461 = vmatprep.subr.bf16.mxu0 0
        %462 = vmatpush1.bf16.msra.mxu0 0
        %463 = vmatprep.subr.bf16.mxu0 0
        %464 = vmatpush1.bf16.msra.mxu0 0
        %465 = vmatprep.subr.bf16.mxu0 0
        %466 = vmatpush1.bf16.msra.mxu0 0
        %467 = vmatprep.subr.bf16.mxu0 0
        %468 = vmatpush1.bf16.msra.mxu0 0
        %469 = vmatprep.subr.bf16.mxu0 0
        %470 = vmatpush1.bf16.msra.mxu0 %v453
        %471 = vmatprep.subr.bf16.mxu0 0
        %472 = vmatpush2.bf16.msra.mxu0 0
        %473 = vmatprep.subr.bf16.mxu0 0
        %474 = vmatpush2.bf16.msra.mxu0 0
        %475 = vmatprep.subr.bf16.mxu0 0
        %476 = vmatpush2.bf16.msra.mxu0 0
        %477 = vmatprep.subr.bf16.mxu0 0
        %478 = vmatpush2.bf16.msra.mxu0 0
        %479 = vmatprep.subr.bf16.mxu0 0
        %480 = vmatpush2.bf16.msra.mxu0 0
        %481 = vmatprep.subr.bf16.mxu0 0
        %482 = vmatpush2.bf16.msra.mxu0 0
        %483 = vmatprep.subr.bf16.mxu0 0
        %484 = vmatpush2.bf16.msra.mxu0 0
        %485 = vmatprep.subr.bf16.mxu0 0
        %486 = vmatpush2.bf16.msra.mxu0 0
        %487 = vmatprep.mubr.bf16.mxu0 0
        %488 = vmatmul.mubr.bf16.gmra.mxu0 %v401
        %v489 = vpop.f32.mrf.mxu0
        %v490 = vadd.f32 0.0, %v489
        %v491 = vpop.f32.mrf.mxu0
        %v492 = vpop.f32.mrf.mxu0
        %v493 = vadd.f32 0.0, %v492
        %v494 = vpop.f32.mrf.mxu0
        %495 = vmatprep.mubr.bf16.mxu0 0
        %496 = vmatmul.mubr.bf16.gmra.mxu0 %v404
        %v497 = vpop.f32.mrf.mxu0
        %v498 = vadd.f32 0.0, %v497
        %v499 = vpop.f32.mrf.mxu0
        %v500 = vpop.f32.mrf.mxu0
        %v501 = vadd.f32 0.0, %v500
        %v502 = vpop.f32.mrf.mxu0
        %503 = vmatprep.mubr.bf16.mxu0 0
        %504 = vmatmul.mubr.bf16.gmra.mxu0 %v407
        %v505 = vpop.f32.mrf.mxu0
        %v506 = vadd.f32 0.0, %v505
        %v507 = vpop.f32.mrf.mxu0
        %v508 = vpop.f32.mrf.mxu0
        %v509 = vadd.f32 0.0, %v508
        %v510 = vpop.f32.mrf.mxu0
        %511 = vmatprep.mubr.bf16.mxu0 0
        %512 = vmatmul.mubr.bf16.gmra.mxu0 %v410
        %v513 = vpop.f32.mrf.mxu0
        %v514 = vadd.f32 0.0, %v513
        %v515 = vpop.f32.mrf.mxu0
        %v516 = vpop.f32.mrf.mxu0
        %v517 = vadd.f32 0.0, %v516
        %v518 = vpop.f32.mrf.mxu0
        %519 = vmatprep.mubr.bf16.mxu0 0
        %520 = vmatmul.mubr.bf16.gmra.mxu0 %v413
        %v521 = vpop.f32.mrf.mxu0
        %v522 = vadd.f32 0.0, %v521
        %v523 = vpop.f32.mrf.mxu0
        %v524 = vpop.f32.mrf.mxu0
        %v525 = vadd.f32 0.0, %v524
        %v526 = vpop.f32.mrf.mxu0
        %527 = vmatprep.mubr.bf16.mxu0 0
        %528 = vmatmul.mubr.bf16.gmra.mxu0 %v416
        %v529 = vpop.f32.mrf.mxu0
        %v530 = vadd.f32 0.0, %v529
        %v531 = vpop.f32.mrf.mxu0
        %v532 = vpop.f32.mrf.mxu0
        %v533 = vadd.f32 0.0, %v532
        %v534 = vpop.f32.mrf.mxu0
        %535 = vmatprep.mubr.bf16.mxu0 0
        %536 = vmatmul.mubr.bf16.gmra.mxu0 %v419
        %v537 = vpop.f32.mrf.mxu0
        %v538 = vadd.f32 0.0, %v537
        %v539 = vpop.f32.mrf.mxu0
        %v540 = vpop.f32.mrf.mxu0
        %v541 = vadd.f32 0.0, %v540
        %v542 = vpop.f32.mrf.mxu0
        %543 = vmatprep.mubr.bf16.mxu0 0
        %544 = vmatmul.mubr.bf16.gmra.mxu0 %v422
        %v545 = vpop.f32.mrf.mxu0
        %v546 = vadd.f32 0.0, %v545
        %v547 = vpop.f32.mrf.mxu0
        %v548 = vpop.f32.mrf.mxu0
        %v549 = vadd.f32 0.0, %v548
        %v550 = vpop.f32.mrf.mxu0
        %551 = vmatprep.mubr.bf16.mxu0 0
        %552 = vmatmul.mubr.bf16.gmra.mxu0 %v425
        %v553 = vpop.f32.mrf.mxu0
        %v554 = vadd.f32 0.0, %v553
        %v555 = vpop.f32.mrf.mxu0
        %v556 = vpop.f32.mrf.mxu0
        %v557 = vadd.f32 0.0, %v556
        %v558 = vpop.f32.mrf.mxu0
        %559 = vmatprep.mubr.bf16.mxu0 0
        %560 = vmatmul.mubr.bf16.gmra.mxu0 %v428
        %v561 = vpop.f32.mrf.mxu0
        %v562 = vadd.f32 0.0, %v561
        %v563 = vpop.f32.mrf.mxu0
        %v564 = vpop.f32.mrf.mxu0
        %v565 = vadd.f32 0.0, %v564
        %v566 = vpop.f32.mrf.mxu0
        %567 = vmatprep.mubr.bf16.mxu0 0
        %568 = vmatmul.mubr.bf16.gmra.mxu0 %v431
        %v569 = vpop.f32.mrf.mxu0
        %v570 = vadd.f32 0.0, %v569
        %v571 = vpop.f32.mrf.mxu0
        %v572 = vpop.f32.mrf.mxu0
        %v573 = vadd.f32 0.0, %v572
        %v574 = vpop.f32.mrf.mxu0
        %575 = vmatprep.mubr.bf16.mxu0 0
        %576 = vmatmul.mubr.bf16.gmra.mxu0 %v434
        %v577 = vpop.f32.mrf.mxu0
        %v578 = vadd.f32 0.0, %v577
        %v579 = vpop.f32.mrf.mxu0
        %v580 = vpop.f32.mrf.mxu0
        %v581 = vadd.f32 0.0, %v580
        %v582 = vpop.f32.mrf.mxu0
        %583 = vmatprep.mubr.bf16.mxu0 0
        %584 = vmatmul.mubr.bf16.gmra.mxu0 %v437
        %v585 = vpop.f32.mrf.mxu0
        %v586 = vadd.f32 0.0, %v585
        %v587 = vpop.f32.mrf.mxu0
        %v588 = vpop.f32.mrf.mxu0
        %v589 = vadd.f32 0.0, %v588
        %v590 = vpop.f32.mrf.mxu0
        %591 = vmatprep.mubr.bf16.mxu0 0
        %592 = vmatmul.mubr.bf16.gmra.mxu0 %v440
        %v593 = vpop.f32.mrf.mxu0
        %v594 = vadd.f32 0.0, %v593
        %v595 = vpop.f32.mrf.mxu0
        %v596 = vpop.f32.mrf.mxu0
        %v597 = vadd.f32 0.0, %v596
        %v598 = vpop.f32.mrf.mxu0
        %599 = vmatprep.mubr.bf16.mxu0 0
        %600 = vmatmul.mubr.bf16.gmra.mxu0 %v443
        %v601 = vpop.f32.mrf.mxu0
        %v602 = vadd.f32 0.0, %v601
        %v603 = vpop.f32.mrf.mxu0
        %v604 = vpop.f32.mrf.mxu0
        %v605 = vadd.f32 0.0, %v604
        %v606 = vpop.f32.mrf.mxu0
        %607 = vmatprep.mubr.bf16.mxu0 0
        %608 = vmatmul.mubr.bf16.gmra.mxu0 %v446
        %v609 = vpop.f32.mrf.mxu0
        %v610 = vadd.f32 0.0, %v609
        %v611 = vpop.f32.mrf.mxu0
        %v612 = vpop.f32.mrf.mxu0
        %v613 = vadd.f32 0.0, %v612
        %v614 = vpop.f32.mrf.mxu0
        %615 = vdwg.mxu0
        %v616 = vadd.f32 %v248, %v490
        %v617 = vadd.f32 %v249, %v493
        %v618 = vadd.f32 %v250, %v498
        %v619 = vadd.f32 %v251, %v501
        %v620 = vadd.f32 %v252, %v506
        %v621 = vadd.f32 %v253, %v509
        %v622 = vadd.f32 %v254, %v514
        %v623 = vadd.f32 %v255, %v517
        %v624 = vadd.f32 %v256, %v522
        %v625 = vadd.f32 %v257, %v525
        %v626 = vadd.f32 %v258, %v530
        %v627 = vadd.f32 %v259, %v533
        %v628 = vadd.f32 %v260, %v538
        %v629 = vadd.f32 %v261, %v541
        %v630 = vadd.f32 %v262, %v546
        %v631 = vadd.f32 %v263, %v549
        %v632 = vadd.f32 %v264, %v554
        %v633 = vadd.f32 %v265, %v557
        %v634 = vadd.f32 %v266, %v562
        %v635 = vadd.f32 %v267, %v565
        %v636 = vadd.f32 %v268, %v570
        %v637 = vadd.f32 %v269, %v573
        %v638 = vadd.f32 %v270, %v578
        %v639 = vadd.f32 %v271, %v581
        %v640 = vadd.f32 %v272, %v586
        %v641 = vadd.f32 %v273, %v589
        %v642 = vadd.f32 %v274, %v594
        %v643 = vadd.f32 %v275, %v597
        %v644 = vadd.f32 %v276, %v602
        %v645 = vadd.f32 %v277, %v605
        %v646 = vadd.f32 %v278, %v610
        %v647 = vadd.f32 %v279, %v613
        %vm648 = vcmask 523264
        %649 = vst.msk [vmem:[#allocation2] sm:$0xff] %vm648, %v616
        %650 = vst.msk [vmem:[#allocation2 + $0x8] sm:$0xff] %vm648, %v617
        %651 = vst.msk [vmem:[#allocation2 + $0x10] sm:$0xff] %vm648, %v618
        %652 = vst.msk [vmem:[#allocation2 + $0x18] sm:$0xff] %vm648, %v619
        %653 = vst.msk [vmem:[#allocation2 + $0x20] sm:$0xff] %vm648, %v620
        %654 = vst.msk [vmem:[#allocation2 + $0x28] sm:$0xff] %vm648, %v621
        %655 = vst.msk [vmem:[#allocation2 + $0x30] sm:$0xff] %vm648, %v622
        %656 = vst.msk [vmem:[#allocation2 + $0x38] sm:$0xff] %vm648, %v623
        %657 = vst.msk [vmem:[#allocation2 + $0x40] sm:$0xff] %vm648, %v624
        %658 = vst.msk [vmem:[#allocation2 + $0x48] sm:$0xff] %vm648, %v625
        %659 = vst.msk [vmem:[#allocation2 + $0x50] sm:$0xff] %vm648, %v626
        %660 = vst.msk [vmem:[#allocation2 + $0x58] sm:$0xff] %vm648, %v627
        %661 = vst.msk [vmem:[#allocation2 + $0x60] sm:$0xff] %vm648, %v628
        %662 = vst.msk [vmem:[#allocation2 + $0x68] sm:$0xff] %vm648, %v629
        %663 = vst.msk [vmem:[#allocation2 + $0x70] sm:$0xff] %vm648, %v630
        %664 = vst.msk [vmem:[#allocation2 + $0x78] sm:$0xff] %vm648, %v631
        %665 = vst.msk [vmem:[#allocation2 + $0x80] sm:$0xff] %vm648, %v632
        %666 = vst.msk [vmem:[#allocation2 + $0x88] sm:$0xff] %vm648, %v633
        %667 = vst.msk [vmem:[#allocation2 + $0x90] sm:$0xff] %vm648, %v634
        %668 = vst.msk [vmem:[#allocation2 + $0x98] sm:$0xff] %vm648, %v635
        %669 = vst.msk [vmem:[#allocation2 + $0xa0] sm:$0xff] %vm648, %v636
        %670 = vst.msk [vmem:[#allocation2 + $0xa8] sm:$0xff] %vm648, %v637
        %671 = vst.msk [vmem:[#allocation2 + $0xb0] sm:$0xff] %vm648, %v638
        %672 = vst.msk [vmem:[#allocation2 + $0xb8] sm:$0xff] %vm648, %v639
        %673 = vst.msk [vmem:[#allocation2 + $0xc0] sm:$0xff] %vm648, %v640
        %674 = vst.msk [vmem:[#allocation2 + $0xc8] sm:$0xff] %vm648, %v641
        %675 = vst.msk [vmem:[#allocation2 + $0xd0] sm:$0xff] %vm648, %v642
        %676 = vst.msk [vmem:[#allocation2 + $0xd8] sm:$0xff] %vm648, %v643
        %677 = vst.msk [vmem:[#allocation2 + $0xe0] sm:$0xff] %vm648, %v644
        %678 = vst.msk [vmem:[#allocation2 + $0xe8] sm:$0xff] %vm648, %v645
        %679 = vst.msk [vmem:[#allocation2 + $0xf0] sm:$0xff] %vm648, %v646
        %680 = vst.msk [vmem:[#allocation2 + $0xf8] sm:$0xff] %vm648, %v647
        // Predicated region
        $region33: #{conv3x3.1} parent=27 // pred_check
          %p681 = pneg %p211
        $region34: #{conv3x3.1} parent=27 // pred_check_branch
          %683 = sbr.rel (%p681) target = $region36
        $region35: #{conv3x3.1} parent=27 // pred_region
          %v684 = vld [vmem:[#allocation2] sm:$0xff]
          %v685 = vld [vmem:[#allocation2 + $0x8] sm:$0xff]
          %v686 = vld [vmem:[#allocation2 + $0x10] sm:$0xff]
          %v687 = vld [vmem:[#allocation2 + $0x18] sm:$0xff]
          %v688 = vld [vmem:[#allocation2 + $0x20] sm:$0xff]
          %v689 = vld [vmem:[#allocation2 + $0x28] sm:$0xff]
          %v690 = vld [vmem:[#allocation2 + $0x30] sm:$0xff]
          %v691 = vld [vmem:[#allocation2 + $0x38] sm:$0xff]
          %v692 = vld [vmem:[#allocation2 + $0x40] sm:$0xff]
          %v693 = vld [vmem:[#allocation2 + $0x48] sm:$0xff]
          %v694 = vld [vmem:[#allocation2 + $0x50] sm:$0xff]
          %v695 = vld [vmem:[#allocation2 + $0x58] sm:$0xff]
          %v696 = vld [vmem:[#allocation2 + $0x60] sm:$0xff]
          %v697 = vld [vmem:[#allocation2 + $0x68] sm:$0xff]
          %v698 = vld [vmem:[#allocation2 + $0x70] sm:$0xff]
          %v699 = vld [vmem:[#allocation2 + $0x78] sm:$0xff]
          %v700 = vld [vmem:[#allocation2 + $0x80] sm:$0xff]
          %v701 = vld [vmem:[#allocation2 + $0x88] sm:$0xff]
          %v702 = vld [vmem:[#allocation2 + $0x90] sm:$0xff]
          %v703 = vld [vmem:[#allocation2 + $0x98] sm:$0xff]
          %v704 = vld [vmem:[#allocation2 + $0xa0] sm:$0xff]
          %v705 = vld [vmem:[#allocation2 + $0xa8] sm:$0xff]
          %v706 = vld [vmem:[#allocation2 + $0xb0] sm:$0xff]
          %v707 = vld [vmem:[#allocation2 + $0xb8] sm:$0xff]
          %v708 = vld [vmem:[#allocation2 + $0xc0] sm:$0xff]
          %v709 = vld [vmem:[#allocation2 + $0xc8] sm:$0xff]
          %v710 = vld [vmem:[#allocation2 + $0xd0] sm:$0xff]
          %v711 = vld [vmem:[#allocation2 + $0xd8] sm:$0xff]
          %v712 = vld [vmem:[#allocation2 + $0xe0] sm:$0xff]
          %v713 = vld [vmem:[#allocation2 + $0xe8] sm:$0xff]
          %v714 = vld [vmem:[#allocation2 + $0xf0] sm:$0xff]
          %v715 = vld [vmem:[#allocation2 + $0xf8] sm:$0xff]
          %v716 = vpack.c.bf16 %v685, %v684
          %v717 = vpack.c.bf16 %v687, %v686
          %v718 = vpack.c.bf16 %v689, %v688
          %v719 = vpack.c.bf16 %v691, %v690
          %v720 = vpack.c.bf16 %v693, %v692
          %v721 = vpack.c.bf16 %v695, %v694
          %v722 = vpack.c.bf16 %v697, %v696
          %v723 = vpack.c.bf16 %v699, %v698
          %v724 = vpack.c.bf16 %v701, %v700
          %v725 = vpack.c.bf16 %v703, %v702
          %v726 = vpack.c.bf16 %v705, %v704
          %v727 = vpack.c.bf16 %v707, %v706
          %v728 = vpack.c.bf16 %v709, %v708
          %v729 = vpack.c.bf16 %v711, %v710
          %v730 = vpack.c.bf16 %v713, %v712
          %v731 = vpack.c.bf16 %v715, %v714
          %v748 = vunpack.c.l.b16 %v716
          %v749 = vunpack.c.h.b16 %v716
          %v750 = vunpack.c.l.b16 %v717
          %v751 = vunpack.c.h.b16 %v717
          %v752 = vunpack.c.l.b16 %v718
          %v753 = vunpack.c.h.b16 %v718
          %v754 = vunpack.c.l.b16 %v719
          %v755 = vunpack.c.h.b16 %v719
          %v756 = vunpack.c.l.b16 %v720
          %v757 = vunpack.c.h.b16 %v720
          %v758 = vunpack.c.l.b16 %v721
          %v759 = vunpack.c.h.b16 %v721
          %v760 = vunpack.c.l.b16 %v722
          %v761 = vunpack.c.h.b16 %v722
          %v762 = vunpack.c.l.b16 %v723
          %v763 = vunpack.c.h.b16 %v723
          %v764 = vunpack.c.l.b16 %v724
          %v765 = vunpack.c.h.b16 %v724
          %v766 = vunpack.c.l.b16 %v725
          %v767 = vunpack.c.h.b16 %v725
          %v768 = vunpack.c.l.b16 %v726
          %v769 = vunpack.c.h.b16 %v726
          %v770 = vunpack.c.l.b16 %v727
          %v771 = vunpack.c.h.b16 %v727
          %v772 = vunpack.c.l.b16 %v728
          %v773 = vunpack.c.h.b16 %v728
          %v774 = vunpack.c.l.b16 %v729
          %v775 = vunpack.c.h.b16 %v729
          %v776 = vunpack.c.l.b16 %v730
          %v777 = vunpack.c.h.b16 %v730
          %v778 = vunpack.c.l.b16 %v731
          %v779 = vunpack.c.h.b16 %v731
          %v780 = vpack.c.b16 %v748, %v748
          %v781 = vpack.c.b16 %v749, %v749
          %v782 = vpack.c.b16 %v750, %v750
          %v783 = vpack.c.b16 %v751, %v751
          %v784 = vpack.c.b16 %v752, %v752
          %v785 = vpack.c.b16 %v753, %v753
          %v786 = vpack.c.b16 %v754, %v754
          %v787 = vpack.c.b16 %v755, %v755
          %v788 = vpack.c.b16 %v756, %v756
          %v789 = vpack.c.b16 %v757, %v757
          %v790 = vpack.c.b16 %v758, %v758
          %v791 = vpack.c.b16 %v759, %v759
          %v792 = vpack.c.b16 %v760, %v760
          %v793 = vpack.c.b16 %v761, %v761
          %v794 = vpack.c.b16 %v762, %v762
          %v795 = vpack.c.b16 %v763, %v763
          %v796 = vpack.c.b16 %v764, %v764
          %v797 = vpack.c.b16 %v765, %v765
          %v798 = vpack.c.b16 %v766, %v766
          %v799 = vpack.c.b16 %v767, %v767
          %v800 = vpack.c.b16 %v768, %v768
          %v801 = vpack.c.b16 %v769, %v769
          %v802 = vpack.c.b16 %v770, %v770
          %v803 = vpack.c.b16 %v771, %v771
          %v804 = vpack.c.b16 %v772, %v772
          %v805 = vpack.c.b16 %v773, %v773
          %v806 = vpack.c.b16 %v774, %v774
          %v807 = vpack.c.b16 %v775, %v775
          %v808 = vpack.c.b16 %v776, %v776
          %v809 = vpack.c.b16 %v777, %v777
          %v810 = vpack.c.b16 %v778, %v778
          %v811 = vpack.c.b16 %v779, %v779
          %vm844 = vcmask 519168
          %845 = vst.msk [vmem:[%s190] sm:$0xf] %vm844, %v780
          %846 = vst.msk [vmem:[%s190 + $0x4] sm:$0xf] %vm844, %v781
          %847 = vst.msk [vmem:[%s190 + $0x8] sm:$0xf] %vm844, %v782
          %848 = vst.msk [vmem:[%s190 + $0xc] sm:$0xf] %vm844, %v783
          %849 = vst.msk [vmem:[%s190 + $0x10] sm:$0xf] %vm844, %v784
          %850 = vst.msk [vmem:[%s190 + $0x14] sm:$0xf] %vm844, %v785
          %851 = vst.msk [vmem:[%s190 + $0x18] sm:$0xf] %vm844, %v786
          %852 = vst.msk [vmem:[%s190 + $0x1c] sm:$0xf] %vm844, %v787
          %853 = vst.msk [vmem:[%s190 + $0x20] sm:$0xf] %vm844, %v788
          %854 = vst.msk [vmem:[%s190 + $0x24] sm:$0xf] %vm844, %v789
          %855 = vst.msk [vmem:[%s190 + $0x28] sm:$0xf] %vm844, %v790
          %856 = vst.msk [vmem:[%s190 + $0x2c] sm:$0xf] %vm844, %v791
          %857 = vst.msk [vmem:[%s190 + $0x30] sm:$0xf] %vm844, %v792
          %858 = vst.msk [vmem:[%s190 + $0x34] sm:$0xf] %vm844, %v793
          %859 = vst.msk [vmem:[%s190 + $0x38] sm:$0xf] %vm844, %v794
          %860 = vst.msk [vmem:[%s190 + $0x3c] sm:$0xf] %vm844, %v795
          %861 = vst.msk [vmem:[%s190 + $0x40] sm:$0xf] %vm844, %v796
          %862 = vst.msk [vmem:[%s190 + $0x44] sm:$0xf] %vm844, %v797
          %863 = vst.msk [vmem:[%s190 + $0x48] sm:$0xf] %vm844, %v798
          %864 = vst.msk [vmem:[%s190 + $0x4c] sm:$0xf] %vm844, %v799
          %865 = vst.msk [vmem:[%s190 + $0x50] sm:$0xf] %vm844, %v800
          %866 = vst.msk [vmem:[%s190 + $0x54] sm:$0xf] %vm844, %v801
          %867 = vst.msk [vmem:[%s190 + $0x58] sm:$0xf] %vm844, %v802
          %868 = vst.msk [vmem:[%s190 + $0x5c] sm:$0xf] %vm844, %v803
          %869 = vst.msk [vmem:[%s190 + $0x60] sm:$0xf] %vm844, %v804
          %870 = vst.msk [vmem:[%s190 + $0x64] sm:$0xf] %vm844, %v805
          %871 = vst.msk [vmem:[%s190 + $0x68] sm:$0xf] %vm844, %v806
          %872 = vst.msk [vmem:[%s190 + $0x6c] sm:$0xf] %vm844, %v807
          %873 = vst.msk [vmem:[%s190 + $0x70] sm:$0xf] %vm844, %v808
          %874 = vst.msk [vmem:[%s190 + $0x74] sm:$0xf] %vm844, %v809
          %875 = vst.msk [vmem:[%s190 + $0x78] sm:$0xf] %vm844, %v810
          %876 = vst.msk [vmem:[%s190 + $0x7c] sm:$0xf] %vm844, %v811
        $region36: #{conv3x3.1} parent=27 // pred_fallthru
          _
        %s877 = sand.u32 %s101, 1
        %s878 = scalar_lea.sflag [#allocation4], %s877
        %s879 = sand.u32 %s101, 1
        %s880 = smul.addr %s879, 128
        %s881 = scalar_lea.vmem [#allocation3], %s880
        // Predicated region
        $region37: #{conv3x3.1} parent=27 // pred_check
          %p882 = pneg %p111
        $region38: #{conv3x3.1} parent=27 // pred_check_branch
          %884 = sbr.rel (%p882) target = $region40
        $region39: #{conv3x3.1} parent=27 // pred_region
          %s885 = smul.u32 32, %s21
          %s887 = ssub.s32 2048, 2048
          %888 = vsyncadd %s878, %s887
          %s889 = sadd.s32 %s22, %s885
          %s890 = smul.addr %s889, 64
          %s891 = scalar_lea.hbm %s2, %s890
          %s892 = sshll.u32 %s881, 4
          %s893 = int_to_ptr.vmem [resolvable:$true] %s892
          %898 = dma.vmem_to_hbm [thread:$0]  %s893, 2048, %s891, %s878, 64, 64, 4
        $region40: #{conv3x3.1} parent=27 // pred_fallthru
          _
      $region28: #{conv3x3.1} parent=5 // pred_fallthru
        _
      %p899 = scmp.le.s32.totalorder 2, %s11
      // Predicated region
      $region41: #{conv3x3.1} parent=5 // pred_check
        %p900 = pneg %p899
      $region42: #{conv3x3.1} parent=5 // pred_check_branch
        %902 = sbr.rel (%p900) target = $region44
      $region43: #{conv3x3.1} parent=5 // pred_region
        %s903 = ssub.s32 %s11, 2
        // Predicated region
        $region45: #{conv3x3.1} parent=43 // pred_check
          %p904 = pneg %p117
        $region46: #{conv3x3.1} parent=43 // pred_check_branch
          %906 = sbr.rel (%p904) target = $region48
        $region47: #{conv3x3.1} parent=43 // pred_region
          %s907 = sand.u32 %s102, 1
          %s908 = scalar_lea.sflag [#allocation4], %s907
          %s909 = sand.u32 %s102, 1
          %s910 = smul.addr %s909, 128
          %s911 = scalar_lea.vmem [#allocation3], %s910
          %912 = dma.done %s908, 2048
        $region48: #{conv3x3.1} parent=43 // pred_fallthru
          _
      $region44: #{conv3x3.1} parent=5 // pred_fallthru
        _
    $region6: #{conv3x3.1} parent=1 // loop_footer
      %s15 = sadd.s32 1, %s11
    $region7: #{conv3x3.1} parent=1 // loop_footer_branch
      %10 = sbr.rel target = $region3
    $region8: #{conv3x3.1} parent=1 // loop_exit
      _
    %913 = vsyncpa [#allocation4], 1
    %s914 = scalar_lea.sflag [#allocation4], 1
    %915 = vsyncpa %s914, 1

</llo_original>
